<compile_context>
chip_gen: v7x
topology: tpu7x:2x2x1
jax: 0.10.0
libtpu: 0.0.40
codegen_flags: <defaults>
</compile_context>

<pallas_src>
import jax
import jax.numpy as jnp
from jax.experimental import pallas as pl
from jax.experimental.pallas import tpu as pltpu

MAX_TILE_B = 2048          # 2048 x 10 f32 blocks (in + out, double-buffered) ~ 320 KiB VMEM
MEGACORE_MIN_ROWS = 256    # below this, a second grid step is pure overhead


def _round_up(n, m):
    return ((n + m - 1) // m) * m


def _cdiv(a, b):
    return -(-a // b)


def mlp_kernel(x_ref, w_ref, b_ref, o_ref):
    # x_ref: (tile_b, 10)  composed-affine input tile
    # w_ref: (10, 10)      composed weight  W1 @ W2 @ W3   (VMEM-resident)
    # b_ref: (1, 10)       composed bias    (b1 @ W2 + b2) @ W3 + b3
    # One MXU matmul + VPU bias add; intermediates never touch scratch.
    y = jnp.dot(x_ref[...], w_ref[...], preferred_element_type=jnp.float32)
    o_ref[...] = (y + b_ref[...]).astype(o_ref.dtype)


def _compose(params):
    """Collapse fc3(fc2(fc1(.))) into a single affine map (module has no activations)."""
    w1, b1, w2, b2, w3, b3 = params
    w_c = (w1 @ w2) @ w3                      # (10, 10)
    b_c = (b1 @ w2 + b2) @ w3 + b3            # (10,)
    return w_c.astype(jnp.float32), b_c.reshape(1, -1).astype(jnp.float32)


def _tiling(batch):
    """Pick (tile_b, grid_steps, batch_pad) with minimal padding waste."""
    bp8 = _round_up(max(batch, 1), 8)
    grid = max(1, _cdiv(bp8, MAX_TILE_B))
    # Give v7x's two TensorCores >=2 independent tiles once the batch is big
    # enough to be past fixed per-step overhead (no-op cost on v5e/v6e).
    if bp8 >= MEGACORE_MIN_ROWS:
        grid = max(grid, 2)
    tile_b = _round_up(_cdiv(bp8, grid), 8)
    batch_pad = grid * tile_b
    return tile_b, grid, batch_pad


@jax.jit
def mlp_forward(x, params):
    """Fused fc3(fc2(fc1(x))). x: [batch, 10] float32. Returns {'y_hat': [batch, 10]}."""
    in_dim = params[0].shape[0]
    out_dim = params[4].shape[1]

    w_c, b_c = _compose(params)   # tiny (10x100 @ 100x100 @ 100x10); fused under jit

    batch = x.shape[0]
    tile_b, grid_steps, batch_pad = _tiling(batch)

    # Pad the batch axis only (at most tile_b - 1 extra rows); feature dim stays 10.
    if batch_pad != batch:
        xp = jnp.zeros((batch_pad, in_dim), x.dtype).at[:batch].set(x)
    else:
        xp = x

    y_pad = pl.pallas_call(
        mlp_kernel,
        out_shape=jax.ShapeDtypeStruct((batch_pad, out_dim), x.dtype),
        grid=(grid_steps,),
        in_specs=[
            # Narrow last dims (10) are legal: they equal the full array dims.
            pl.BlockSpec((tile_b, in_dim), lambda i: (i, 0)),    # batch-tiled input
            pl.BlockSpec((in_dim, out_dim), lambda i: (0, 0)),   # composed weight, VMEM-resident
            pl.BlockSpec((1, out_dim), lambda i: (0, 0)),        # composed bias, VMEM-resident
        ],
        out_specs=pl.BlockSpec((tile_b, out_dim), lambda i: (i, 0)),
        compiler_params=pltpu.CompilerParams(
            # Batch tiles are independent -> shard across TensorCores on v7x;
            # harmless no-op on single-TC v5e/v6e.
            dimension_semantics=("parallel",),
        ),
    )(xp, w_c, b_c)

    return {"y_hat": y_pad[:batch] if batch_pad != batch else y_pad}


def init_params(key):
    # Deterministic init mimicking nn.Linear's uniform(-1/sqrt(fan_in), 1/sqrt(fan_in)).
    def linear(key, fan_in, fan_out):
        kw, kb = jax.random.split(key)
        bound = 1.0 / jnp.sqrt(fan_in)
        w = jax.random.uniform(kw, (fan_in, fan_out), jnp.float32, -bound, bound)
        b = jax.random.uniform(kb, (fan_out,), jnp.float32, -bound, bound)
        return w, b

    k1, k2, k3 = jax.random.split(key, 3)
    w1, b1 = linear(k1, 10, 100)
    w2, b2 = linear(k2, 100, 100)
    w3, b3 = linear(k3, 100, 10)
    return (w1, b1, w2, b2, w3, b3)


if __name__ == "__main__":
    key = jax.random.PRNGKey(0)
    k_params, k_x = jax.random.split(key)
    params = init_params(k_params)

    batch = 8
    x = jax.random.normal(k_x, (batch, 10), jnp.float32)

    out = mlp_forward(x, params)
    y = jax.block_until_ready(out["y_hat"])

    # Pure-JAX reference (same math as the PyTorch module: three Linears, no activation).
    w1, b1, w2, b2, w3, b3 = params
    ref = ((x @ w1 + b1) @ w2 + b2) @ w3 + b3
    assert y.shape == (batch, 10)
    # Composed-affine form differs only by FP reassociation; well inside 2e-4.
    assert jnp.allclose(y, ref, atol=2e-4, rtol=2e-4), float(jnp.max(jnp.abs(y - ref)))
    print("KERNEL_OK")
</pallas_src>

<mosaic_0001>
module attributes {stable_mosaic.version = 11 : i64} {
  func.func @mlp_kernel(%arg0: i32, %arg1: memref<8x10xf32, #tpu.memory_space<vmem>>, %arg2: memref<10x10xf32, #tpu.memory_space<vmem>>, %arg3: memref<1x10xf32, #tpu.memory_space<vmem>>, %arg4: memref<8x10xf32, #tpu.memory_space<vmem>>) attributes {dimension_semantics = [#tpu.dimension_semantics<parallel>], iteration_bounds = array<i64: 1>, scalar_prefetch = 0 : i64, scratch_operands = 0 : i64, tpu.core_type = #tpu.core_type<tc>, window_params = [{transform_indices = @transform_0, window_bounds = array<i64: 8, 10>}, {pipeline_mode = #tpu.pipeline_mode<synchronous>, transform_indices = @transform_1, window_bounds = array<i64: 10, 10>}, {pipeline_mode = #tpu.pipeline_mode<synchronous>, transform_indices = @transform_2, window_bounds = array<i64: 1, 10>}, {transform_indices = @transform_3, window_bounds = array<i64: 8, 10>}]} {
    %c0 = arith.constant 0 : index
    %c0_0 = arith.constant 0 : index
    %0 = vector.load %arg1[%c0, %c0_0] : memref<8x10xf32, #tpu.memory_space<vmem>>, vector<8x10xf32>
    %c0_1 = arith.constant 0 : index
    %c0_2 = arith.constant 0 : index
    %1 = vector.load %arg2[%c0_1, %c0_2] : memref<10x10xf32, #tpu.memory_space<vmem>>, vector<10x10xf32>
    %cst = arith.constant dense<0.000000e+00> : vector<8x10xf32>
    %2 = tpu.matmul %0, %1, %cst {dimension_numbers = #tpu.dot_dimension_numbers<[1], [0], [0], [1], [0, 0, 1, 1], [], []>} : vector<8x10xf32>, vector<10x10xf32>, vector<8x10xf32> -> vector<8x10xf32>
    %c0_3 = arith.constant 0 : index
    %c0_4 = arith.constant 0 : index
    %3 = vector.load %arg3[%c0_3, %c0_4] : memref<1x10xf32, #tpu.memory_space<vmem>>, vector<1x10xf32>
    %4 = vector.broadcast %3 : vector<1x10xf32> to vector<8x10xf32>
    %5 = arith.addf %2, %4 : vector<8x10xf32>
    %c0_5 = arith.constant 0 : index
    %c0_6 = arith.constant 0 : index
    %6 = vector.load %arg4[%c0_5, %c0_6] : memref<8x10xf32, #tpu.memory_space<vmem>>, vector<8x10xf32>
    tpu.vector_store %arg4[%c0_5, %c0_6], %5 {strides = array<i32>} : memref<8x10xf32, #tpu.memory_space<vmem>>, vector<8x10xf32>,
    return
  }
  func.func @transform_0(%arg0: i32) -> (i32, i32) {
    %c0_i32 = arith.constant 0 : i32
    %c0_i32_0 = arith.constant 0 : i32
    return %arg0, %c0_i32 : i32, i32
  }
  func.func @transform_1(%arg0: i32) -> (i32, i32) {
    %c0_i32 = arith.constant 0 : i32
    %c0_i32_0 = arith.constant 0 : i32
    %c0_i32_1 = arith.constant 0 : i32
    return %c0_i32, %c0_i32_0 : i32, i32
  }
  func.func @transform_2(%arg0: i32) -> (i32, i32) {
    %c0_i32 = arith.constant 0 : i32
    %c0_i32_0 = arith.constant 0 : i32
    %c0_i32_1 = arith.constant 0 : i32
    return %c0_i32, %c0_i32_0 : i32, i32
  }
  func.func @transform_3(%arg0: i32) -> (i32, i32) {
    %c0_i32 = arith.constant 0 : i32
    %c0_i32_0 = arith.constant 0 : i32
    return %arg0, %c0_i32 : i32, i32
  }
}

</mosaic_0001>

<llo_original>
// kernel: mlp_forward.1
$region0: #{mlp_forward.1}
  #allocation0 [shape = 'u32[]', space=smem, size = 0x4, offset = 0x4, fixed_abs, tag = 'smem constant byte address 0x4 - core index']
  #allocation1 [shape = 'u32[144,128]{1,0:T(1,128)}', space=vmem, size = 0x12000, scoped, tag = 'internal scratch']
  %s0 = inlined_call_operand.vmem [shape: f32[8,10], index: 0, kind: input, shape index: {}]
  %s1 = inlined_call_operand.vmem [shape: f32[10,10], index: 1, kind: input, shape index: {}]
  %s2 = inlined_call_operand.vmem [shape: f32[1,10], index: 2, kind: input, shape index: {}]
  %s3 = inlined_call_operand.hbm [shape: f32[8,10], index: 3, kind: output, shape index: {}]
  %s4 = sld [smem:[#allocation0]]
  $region22: #{mlp_forward.1} parent=0
    _
  %s6 = ssub.s32 1, %s4
  %s7 = scalar_select 0, %s6, %s4
  $region1: #{mlp_forward.1} parent=0
    #allocation2 [shape = 'u8[4096]{0}', space=vmem, size = 0x1000, scoped, tag = 'output window, operand 0, single buffered']
    #allocation3 [shape = 's32[1]{0}', space=sflag, size = 0x4, scoped, tag = 'scoped memory for mlp_forward.1']
    %8 = vsyncpa [#allocation3], 0
    // Predicated region
    $region2: #{mlp_forward.1} parent=1 // pred_check
      _
    $region3: #{mlp_forward.1} parent=1 // pred_check_branch
      %10 = sbr.rel (0) target = $region5
    $region4: #{mlp_forward.1} parent=1 // pred_region
      _
    $region5: #{mlp_forward.1} parent=1 // pred_fallthru
      _
    // Predicated region
    $region6: #{mlp_forward.1} parent=1 // pred_check
      _
    $region7: #{mlp_forward.1} parent=1 // pred_check_branch
      %12 = sbr.rel (0) target = $region9
    $region8: #{mlp_forward.1} parent=1 // pred_region
      _
    $region9: #{mlp_forward.1} parent=1 // pred_fallthru
      _
    // Predicated region
    $region10: #{mlp_forward.1} parent=1 // pred_check
      _
    $region11: #{mlp_forward.1} parent=1 // pred_check_branch
      %14 = sbr.rel (0) target = $region13
    $region12: #{mlp_forward.1} parent=1 // pred_region
      _
    $region13: #{mlp_forward.1} parent=1 // pred_fallthru
      _
    %v15 = vld [vmem:[%s0] sm:$0xff]
    %v16 = vld [vmem:[%s1] sm:$0xff]
    %v17 = vld [vmem:[%s1 + $0x8] sm:$0x3]
    %v18 = vld [vmem:[%s2] sm:$0x1]
    %v20 = vlaneseq
    %v21 = vshrl.u32 %v20, 7
    %v22 = vsub.s32 0, %v21
    %v23 = vrot.slane %v18, %v22
    %vm25 = vcmask 80896
    %v27 = vsel %vm25, %v15, 0
    %vm29 = vcmask 1041408
    %v31 = vsel %vm29, %v17, 0
    %33 = vmatprep.subr.mxu0 0.0
    %34 = vmatpush1.msra.mxu0 %v16
    %35 = vmatprep.subr.mxu0 0.0
    %36 = vmatpush1.msra.mxu0 %v31
    %37 = vmatprep.subr.mxu0 0.0
    %38 = vmatpush1.msra.mxu0 0.0
    %39 = vmatprep.subr.mxu0 0.0
    %40 = vmatpush1.msra.mxu0 0.0
    %41 = vmatprep.subr.mxu0 0.0
    %42 = vmatpush1.msra.mxu0 0.0
    %43 = vmatprep.subr.mxu0 0.0
    %44 = vmatpush1.msra.mxu0 0.0
    %45 = vmatprep.subr.mxu0 0.0
    %46 = vmatpush1.msra.mxu0 0.0
    %47 = vmatprep.subr.mxu0 0.0
    %48 = vmatpush1.msra.mxu0 0.0
    %49 = vmatprep.subr.mxu0 0.0
    %50 = vmatpush1.msra.mxu0 0.0
    %51 = vmatprep.subr.mxu0 0.0
    %52 = vmatpush1.msra.mxu0 0.0
    %53 = vmatprep.subr.mxu0 0.0
    %54 = vmatpush1.msra.mxu0 0.0
    %55 = vmatprep.subr.mxu0 0.0
    %56 = vmatpush1.msra.mxu0 0.0
    %57 = vmatprep.subr.mxu0 0.0
    %58 = vmatpush1.msra.mxu0 0.0
    %59 = vmatprep.subr.mxu0 0.0
    %60 = vmatpush1.msra.mxu0 0.0
    %61 = vmatprep.subr.mxu0 0.0
    %62 = vmatpush1.msra.mxu0 0.0
    %63 = vmatprep.subr.mxu0 0.0
    %64 = vmatpush1.msra.mxu0 0.0
    %65 = vmatprep.subr.mxu0 0.0
    %66 = vmatpush1.msra.mxu0 0.0
    %67 = vmatprep.subr.mxu0 0.0
    %68 = vmatpush1.msra.mxu0 0.0
    %69 = vmatprep.subr.mxu0 0.0
    %70 = vmatpush1.msra.mxu0 0.0
    %71 = vmatprep.subr.mxu0 0.0
    %72 = vmatpush1.msra.mxu0 0.0
    %73 = vmatprep.subr.mxu0 0.0
    %74 = vmatpush1.msra.mxu0 0.0
    %75 = vmatprep.subr.mxu0 0.0
    %76 = vmatpush1.msra.mxu0 0.0
    %77 = vmatprep.subr.mxu0 0.0
    %78 = vmatpush1.msra.mxu0 0.0
    %79 = vmatprep.subr.mxu0 0.0
    %80 = vmatpush1.msra.mxu0 0.0
    %81 = vmatprep.subr.mxu0 0.0
    %82 = vmatpush1.msra.mxu0 0.0
    %83 = vmatprep.subr.mxu0 0.0
    %84 = vmatpush1.msra.mxu0 0.0
    %85 = vmatprep.subr.mxu0 0.0
    %86 = vmatpush1.msra.mxu0 0.0
    %87 = vmatprep.subr.mxu0 0.0
    %88 = vmatpush1.msra.mxu0 0.0
    %89 = vmatprep.subr.mxu0 0.0
    %90 = vmatpush1.msra.mxu0 0.0
    %91 = vmatprep.subr.mxu0 0.0
    %92 = vmatpush1.msra.mxu0 0.0
    %93 = vmatprep.subr.mxu0 0.0
    %94 = vmatpush1.msra.mxu0 0.0
    %95 = vmatprep.subr.mxu0 0.0
    %96 = vmatpush1.msra.mxu0 0.0
    %97 = vmatprep.mubr.f32.mxu0 0.0
    %98 = vmatmul.mubr.f32.gmra.mrb[0].mxu0 %v27
    %v99 = vpop.f32.mrb[0].mxu0
    %v100 = vadd.f32 %v23, %v99
    %v101 = vpop.f32.mrb[0].mxu0
    %102 = vdwg.mxu0
    %103 = vst.msk [vmem:[#allocation2] sm:$0xff] %vm25, %v100
    // Predicated region
    $region14: #{mlp_forward.1} parent=1 // pred_check
      _
    $region15: #{mlp_forward.1} parent=1 // pred_check_branch
      %105 = sbr.rel (0) target = $region17
    $region16: #{mlp_forward.1} parent=1 // pred_region
      %s107 = ssub.s32 128, 128
      %108 = vsyncadd [#allocation3], %s107
      %s110 = sshll.u32 [#allocation2], 4
      %s111 = int_to_ptr.vmem [resolvable:$true] %s110
      %113 = dma.vmem_to_hbm [thread:$0]  %s111, 128, %s3, [#allocation3]
    $region17: #{mlp_forward.1} parent=1 // pred_fallthru
      _
    // Predicated region
    $region18: #{mlp_forward.1} parent=1 // pred_check
      _
    $region19: #{mlp_forward.1} parent=1 // pred_check_branch
      %115 = sbr.rel (0) target = $region21
    $region20: #{mlp_forward.1} parent=1 // pred_region
      %116 = dma.done [#allocation3], 128
    $region21: #{mlp_forward.1} parent=1 // pred_fallthru
      _
    %117 = vsyncpa [#allocation3], 1

</llo_original>
